<compile_context>
chip_gen: v6e
topology: v6e:2x2x1
jax: 0.10.0
libtpu: 0.0.40
codegen_flags: <defaults>
</compile_context>

<pallas_src>
import functools
import math

import jax
import jax.numpy as jnp
from jax.experimental import pallas as pl
from jax.experimental.pallas import tpu as pltpu

_MIB = 1024 * 1024


# ---------------------------------------------------------------------------
# Kernels
# ---------------------------------------------------------------------------

def _fused_residual_kernel(fn, x_ref, o_ref):
    # x_ref / o_ref: (TB, W) row block.  fn is applied per block (valid for
    # elementwise / per-last-axis fns); add happens in the promoted dtype and
    # we cast only at the store.
    x = x_ref[...]
    o_ref[...] = (fn(x) + x).astype(o_ref.dtype)


def _add_residual_kernel(fx_ref, x_ref, o_ref):
    # Literal ResidualAdd.forward with fn(x) precomputed: out = fn(x) + x.
    # No pre-cast of fx: the add runs in the naturally promoted dtype.
    o_ref[...] = (fx_ref[...] + x_ref[...]).astype(o_ref.dtype)


# ---------------------------------------------------------------------------
# Hardware / tiling helpers
# ---------------------------------------------------------------------------

def _tpu_vmem_capacity_bytes():
    """Physical per-core VMEM; conservative 64 MiB fallback (v7x-sized)."""
    try:
        cap = int(pltpu.get_tpu_info().vmem_capacity_bytes)
        if cap > 0:
            return cap
    except Exception:
        pass
    return 64 * _MIB


def _sublane_pack(itemsize):
    """Rows per fully-packed vreg sublane group: 8 (f32), 16 (bf16), 32 (i8)."""
    return max(8, 32 // max(int(itemsize), 1))


def _flatten_lane_dense(x):
    """2-D (rows, width) view with width a multiple of 128 when possible so
    every store is an unmasked, lane-dense vst.  Falls back to (N, last_dim)
    when the total size is not divisible by 128."""
    total = x.size
    if total % 128 == 0:
        width = 128
        for k in (16, 8, 4, 2):          # prefer rows up to 2048 lanes wide
            if total % (128 * k) == 0:
                width = 128 * k
                break
        return x.reshape(total // width, width)
    # TODO(synk): total not divisible by 128 -> masked partial stores; padding
    # would fix this but complicates the residual semantics.
    last = x.shape[-1]
    return x.reshape(total // last, last)


def _pick_block_rows(n_rows, row_bytes, sublane_pack, min_steps, target_bytes):
    """Big slabs to amortise per-step overhead / fill HBM BW, but keep at
    least `min_steps` grid steps for pipelining (and both TCs on v7x)."""
    if n_rows <= sublane_pack:
        return n_rows
    tb = max(sublane_pack, int(target_bytes) // max(row_bytes, 1))
    tb = min(tb, n_rows)
    while tb > sublane_pack and pl.cdiv(n_rows, tb) < min_steps:
        tb = max(sublane_pack, tb // 2)
    if tb != n_rows:
        tb = max(sublane_pack, (tb // sublane_pack) * sublane_pack)
    return tb


# ---------------------------------------------------------------------------
# Wrapper
# ---------------------------------------------------------------------------

def residual_add(fn, x, *, fuse=True, fn_elementwise=True, block_rows=None,
                 **kwargs):
    """Pallas TPU equivalent of ResidualAdd: returns fn(x, **kwargs) + x.

    fuse=True  : fn is traced into the kernel and applied per row block.
                 WARNING: this silently assumes fn is elementwise (or, with
                 fn_elementwise=False, acts only along the last axis) and is
                 invariant to flattening the leading dims; fns that mix data
                 across batch/sequence axes must use fuse=False.
                 Note the ragged last block evaluates fn on padded garbage
                 rows (results are masked on store, so outputs are correct).
    fuse=False : fn runs as normal XLA on the full tensor (arbitrary fn); the
                 Pallas kernel fuses only the residual addition.

    Output dtype follows PyTorch's in-place `x += res`: it is fn(x)'s dtype;
    the add itself is performed in the promoted dtype inside the kernel.
    """
    orig_shape = x.shape

    # ---- lane-dense 2-D view ---------------------------------------------
    if fuse and not fn_elementwise:
        D = orig_shape[-1]
        x2 = x.reshape(x.size // D, D)       # fn needs the true last axis
    else:
        x2 = _flatten_lane_dense(x)
    N, W = x2.shape

    # ---- operands / kernel -------------------------------------------------
    if fuse:
        out_dtype = jax.eval_shape(lambda v: fn(v, **kwargs), x).dtype
        operands = (x2,)
        kernel = functools.partial(_fused_residual_kernel,
                                   lambda v: fn(v, **kwargs))
        aliases = {}
    else:
        fx = fn(x, **kwargs)                 # arbitrary fn via XLA
        out_dtype = fx.dtype
        fx2 = fx.reshape(N, W)               # no pre-cast: add in promoted dtype
        operands = (fx2, x2)
        kernel = _add_residual_kernel
        aliases = {0: 0}                     # donate fx's HBM buffer to out

    itemsizes = [jnp.dtype(op.dtype).itemsize for op in operands]
    itemsizes.append(jnp.dtype(out_dtype).itemsize)
    n_in = len(operands)
    n_bufs = 2 * (n_in + 1)                  # double-buffered inputs + output

    # ---- generation-aware VMEM budget & block size --------------------------
    vmem_cap = _tpu_vmem_capacity_bytes()
    headroom = 8 * _MIB                      # Mosaic scratch / fn temporaries
    vmem_budget = max(32 * _MIB,
                      min(int(0.8 * vmem_cap), vmem_cap - 16 * _MIB))
    # v7x (64 MiB parts) shards the "parallel" axis over 2 TensorCores.
    min_steps = 4 if vmem_cap <= 64 * _MIB else 2

    row_bytes = W * max(itemsizes)
    pack = _sublane_pack(min(itemsizes))
    if block_rows is None:
        per_buf_budget = max((vmem_budget - headroom) // n_bufs, 512 * 1024)
        target = min(8 * _MIB, per_buf_budget)
        tb = _pick_block_rows(N, row_bytes, pack, min_steps, target)
    else:
        tb = max(1, min(int(block_rows), N))

    footprint = 2 * tb * W * sum(itemsizes)  # actual double-buffered bytes
    vmem_limit = int(min(vmem_budget, max(footprint + headroom, 32 * _MIB)))

    grid = (pl.cdiv(N, tb),)
    row_spec = pl.BlockSpec((tb, W), lambda i: (i, 0))

    # ---- advisory cost estimate ---------------------------------------------
    bytes_accessed = x2.size * sum(itemsizes)
    cost = None
    if fuse:
        try:
            cost = pl.estimate_cost(lambda v: fn(v, **kwargs) + v, x2)
        except Exception:
            cost = None
    if cost is None:
        cost = pl.CostEstimate(flops=x2.size, transcendentals=0,
                               bytes_accessed=bytes_accessed)

    out = pl.pallas_call(
        kernel,
        out_shape=jax.ShapeDtypeStruct((N, W), out_dtype),
        grid_spec=pltpu.PrefetchScalarGridSpec(
            num_scalar_prefetch=0,
            grid=grid,
            in_specs=[row_spec] * n_in,
            out_specs=row_spec,
        ),
        compiler_params=pltpu.CompilerParams(
            dimension_semantics=("parallel",),
            vmem_limit_bytes=vmem_limit,
        ),
        cost_estimate=cost,
        input_output_aliases=aliases,
    )(*operands)
    return out.reshape(orig_shape)


# ---------------------------------------------------------------------------
# Demo / self-test
# ---------------------------------------------------------------------------

if __name__ == "__main__":
    key = jax.random.PRNGKey(0)
    B, S, D = 2, 64, 128                       # (batch, seq, d_model)-style input
    x = jax.random.normal(key, (B, S, D), dtype=jnp.float32)

    # (1) fused path: elementwise fn (GELU) applied inside the kernel.
    run_fused = jax.jit(lambda v: residual_add(jax.nn.gelu, v, fuse=True))
    out_fused = jax.block_until_ready(run_fused(x))
    ref_fused = jax.nn.gelu(x) + x
    assert out_fused.shape == x.shape and out_fused.dtype == ref_fused.dtype
    assert jnp.allclose(out_fused, ref_fused, atol=1e-5, rtol=1e-5), \
        "fused residual_add mismatch vs reference"

    # (2) general path: fn mixes across the sequence axis, so it runs in XLA
    #     and the Pallas kernel fuses only the residual add.
    fn_mix = lambda v: jax.nn.softmax(v, axis=1)
    run_add = jax.jit(lambda v: residual_add(fn_mix, v, fuse=False))
    out_add = jax.block_until_ready(run_add(x))
    ref_add = fn_mix(x) + x
    assert out_add.shape == x.shape
    assert jnp.allclose(out_add, ref_add, atol=1e-5, rtol=1e-5), \
        "add-only residual_add mismatch vs reference"

    # (3) DBConformer-style small d_model (not a multiple of 128) in bf16:
    #     exercises the lane-dense repack and dtype-aware sublane packing.
    x3 = jax.random.normal(jax.random.PRNGKey(1), (2, 8, 40), dtype=jnp.bfloat16)
    run3 = jax.jit(lambda v: residual_add(jax.nn.silu, v, fuse=True))
    out3 = jax.block_until_ready(run3(x3))
    ref3 = jax.nn.silu(x3) + x3
    assert out3.shape == x3.shape
    assert jnp.allclose(out3.astype(jnp.float32), ref3.astype(jnp.float32),
                        atol=2e-2, rtol=2e-2), \
        "bf16 lane-dense residual_add mismatch vs reference"

    print("KERNEL_OK")
</pallas_src>

<mosaic_0001>
module attributes {stable_mosaic.version = 11 : i64} {
  func.func @_fused_residual_kernel(%arg0: i32, %arg1: memref<8x2048xf32, #tpu.memory_space<vmem>>, %arg2: memref<8x2048xf32, #tpu.memory_space<vmem>>) attributes {dimension_semantics = [#tpu.dimension_semantics<parallel>], iteration_bounds = array<i64: 1>, scalar_prefetch = 0 : i64, scratch_operands = 0 : i64, tpu.core_type = #tpu.core_type<tc>, window_params = [{transform_indices = @transform_0, window_bounds = array<i64: 8, 2048>}, {transform_indices = @transform_1, window_bounds = array<i64: 8, 2048>}]} {
    %c0 = arith.constant 0 : index
    %c0_0 = arith.constant 0 : index
    %0 = vector.load %arg1[%c0, %c0_0] : memref<8x2048xf32, #tpu.memory_space<vmem>>, vector<8x2048xf32>
    %1 = arith.mulf %0, %0 : vector<8x2048xf32>
    %2 = arith.mulf %0, %1 : vector<8x2048xf32>
    %cst = arith.constant 4.471500e-02 : f32
    %3 = vector.broadcast %cst : f32 to vector<8x2048xf32>
    %4 = arith.mulf %3, %2 : vector<8x2048xf32>
    %5 = arith.addf %0, %4 : vector<8x2048xf32>
    %cst_1 = arith.constant 0.797884583 : f32
    %6 = vector.broadcast %cst_1 : f32 to vector<8x2048xf32>
    %7 = arith.mulf %6, %5 : vector<8x2048xf32>
    %8 = math.tanh %7 : vector<8x2048xf32>
    %cst_2 = arith.constant 1.000000e+00 : f32
    %9 = vector.broadcast %cst_2 : f32 to vector<8x2048xf32>
    %10 = arith.addf %9, %8 : vector<8x2048xf32>
    %cst_3 = arith.constant 5.000000e-01 : f32
    %11 = vector.broadcast %cst_3 : f32 to vector<8x2048xf32>
    %12 = arith.mulf %11, %10 : vector<8x2048xf32>
    %13 = arith.mulf %0, %12 : vector<8x2048xf32>
    %14 = arith.addf %13, %0 : vector<8x2048xf32>
    %c0_4 = arith.constant 0 : index
    %c0_5 = arith.constant 0 : index
    %15 = vector.load %arg2[%c0_4, %c0_5] : memref<8x2048xf32, #tpu.memory_space<vmem>>, vector<8x2048xf32>
    tpu.vector_store %arg2[%c0_4, %c0_5], %14 {strides = array<i32>} : memref<8x2048xf32, #tpu.memory_space<vmem>>, vector<8x2048xf32>,
    return
  }
  func.func @transform_0(%arg0: i32) -> (i32, i32) {
    %c0_i32 = arith.constant 0 : i32
    %c0_i32_0 = arith.constant 0 : i32
    return %arg0, %c0_i32 : i32, i32
  }
  func.func @transform_1(%arg0: i32) -> (i32, i32) {
    %c0_i32 = arith.constant 0 : i32
    %c0_i32_0 = arith.constant 0 : i32
    return %arg0, %c0_i32 : i32, i32
  }
}

</mosaic_0001>

<llo_original>
// kernel: _lambda_.1
$region0: #{_lambda_.1}
  #allocation0 [shape = 'u32[]', space=smem, size = 0x4, offset = 0x4, fixed_abs, tag = 'smem constant byte address 0x4 - core index']
  #allocation1 [shape = 'u32[144,128]{1,0:T(1,128)}', space=vmem, size = 0x12000, scoped, tag = 'internal scratch']
  %s0 = inlined_call_operand.vmem [shape: f32[8,2048], index: 0, kind: input, shape index: {}]
  %s1 = inlined_call_operand.vmem [shape: f32[8,2048], index: 1, kind: output, shape index: {}]
  %s2 = sld [smem:[#allocation0]]
  $region14: #{_lambda_.1} parent=0
    _
  %s4 = ssub.s32 1, %s2
  %s5 = scalar_select 0, %s4, %s2
  // Predicated region
  $region2: #{_lambda_.1} parent=0 // pred_check
    _
  $region3: #{_lambda_.1} parent=0 // pred_check_branch
    %7 = sbr.rel (0) target = $region5
  $region4: #{_lambda_.1} parent=0 // pred_region
    _
  $region5: #{_lambda_.1} parent=0 // pred_fallthru
    _
  %v8 = vld [vmem:[%s0] sm:$0xff]
  %v9 = vld [vmem:[%s0 + $0x8] sm:$0xff]
  %v10 = vld [vmem:[%s0 + $0x10] sm:$0xff]
  %v11 = vld [vmem:[%s0 + $0x18] sm:$0xff]
  %v12 = vld [vmem:[%s0 + $0x20] sm:$0xff]
  %v13 = vld [vmem:[%s0 + $0x28] sm:$0xff]
  %v14 = vld [vmem:[%s0 + $0x30] sm:$0xff]
  %v15 = vld [vmem:[%s0 + $0x38] sm:$0xff]
  %v16 = vld [vmem:[%s0 + $0x40] sm:$0xff]
  %v17 = vld [vmem:[%s0 + $0x48] sm:$0xff]
  %v18 = vld [vmem:[%s0 + $0x50] sm:$0xff]
  %v19 = vld [vmem:[%s0 + $0x58] sm:$0xff]
  %v20 = vld [vmem:[%s0 + $0x60] sm:$0xff]
  %v21 = vld [vmem:[%s0 + $0x68] sm:$0xff]
  %v22 = vld [vmem:[%s0 + $0x70] sm:$0xff]
  %v23 = vld [vmem:[%s0 + $0x78] sm:$0xff]
  %v24 = vmul.f32 %v8, %v8
  %v25 = vmul.f32 %v9, %v9
  %v26 = vmul.f32 %v10, %v10
  %v27 = vmul.f32 %v11, %v11
  %v28 = vmul.f32 %v12, %v12
  %v29 = vmul.f32 %v13, %v13
  %v30 = vmul.f32 %v14, %v14
  %v31 = vmul.f32 %v15, %v15
  %v32 = vmul.f32 %v16, %v16
  %v33 = vmul.f32 %v17, %v17
  %v34 = vmul.f32 %v18, %v18
  %v35 = vmul.f32 %v19, %v19
  %v36 = vmul.f32 %v20, %v20
  %v37 = vmul.f32 %v21, %v21
  %v38 = vmul.f32 %v22, %v22
  %v39 = vmul.f32 %v23, %v23
  %v40 = vmul.f32 %v8, %v24
  %v41 = vmul.f32 %v9, %v25
  %v42 = vmul.f32 %v10, %v26
  %v43 = vmul.f32 %v11, %v27
  %v44 = vmul.f32 %v12, %v28
  %v45 = vmul.f32 %v13, %v29
  %v46 = vmul.f32 %v14, %v30
  %v47 = vmul.f32 %v15, %v31
  %v48 = vmul.f32 %v16, %v32
  %v49 = vmul.f32 %v17, %v33
  %v50 = vmul.f32 %v18, %v34
  %v51 = vmul.f32 %v19, %v35
  %v52 = vmul.f32 %v20, %v36
  %v53 = vmul.f32 %v21, %v37
  %v54 = vmul.f32 %v22, %v38
  %v55 = vmul.f32 %v23, %v39
  %v56 = vmul.f32 %v40, 0.044715
  %v57 = vmul.f32 %v41, 0.044715
  %v58 = vmul.f32 %v42, 0.044715
  %v59 = vmul.f32 %v43, 0.044715
  %v60 = vmul.f32 %v44, 0.044715
  %v61 = vmul.f32 %v45, 0.044715
  %v62 = vmul.f32 %v46, 0.044715
  %v63 = vmul.f32 %v47, 0.044715
  %v64 = vmul.f32 %v48, 0.044715
  %v65 = vmul.f32 %v49, 0.044715
  %v66 = vmul.f32 %v50, 0.044715
  %v67 = vmul.f32 %v51, 0.044715
  %v68 = vmul.f32 %v52, 0.044715
  %v69 = vmul.f32 %v53, 0.044715
  %v70 = vmul.f32 %v54, 0.044715
  %v71 = vmul.f32 %v55, 0.044715
  %v72 = vadd.f32 %v8, %v56
  %v73 = vadd.f32 %v9, %v57
  %v74 = vadd.f32 %v10, %v58
  %v75 = vadd.f32 %v11, %v59
  %v76 = vadd.f32 %v12, %v60
  %v77 = vadd.f32 %v13, %v61
  %v78 = vadd.f32 %v14, %v62
  %v79 = vadd.f32 %v15, %v63
  %v80 = vadd.f32 %v16, %v64
  %v81 = vadd.f32 %v17, %v65
  %v82 = vadd.f32 %v18, %v66
  %v83 = vadd.f32 %v19, %v67
  %v84 = vadd.f32 %v20, %v68
  %v85 = vadd.f32 %v21, %v69
  %v86 = vadd.f32 %v22, %v70
  %v87 = vadd.f32 %v23, %v71
  %v88 = vmul.f32 %v72, 0.7978846
  %v89 = vmul.f32 %v73, 0.7978846
  %v90 = vmul.f32 %v74, 0.7978846
  %v91 = vmul.f32 %v75, 0.7978846
  %v92 = vmul.f32 %v76, 0.7978846
  %v93 = vmul.f32 %v77, 0.7978846
  %v94 = vmul.f32 %v78, 0.7978846
  %v95 = vmul.f32 %v79, 0.7978846
  %v96 = vmul.f32 %v80, 0.7978846
  %v97 = vmul.f32 %v81, 0.7978846
  %v98 = vmul.f32 %v82, 0.7978846
  %v99 = vmul.f32 %v83, 0.7978846
  %v100 = vmul.f32 %v84, 0.7978846
  %v101 = vmul.f32 %v85, 0.7978846
  %v102 = vmul.f32 %v86, 0.7978846
  %v103 = vmul.f32 %v87, 0.7978846
  %v104 = vtanh.pop %v88
  %v105 = vtanh.pop %v89
  %v106 = vtanh.pop %v90
  %v107 = vtanh.pop %v91
  %v108 = vtanh.pop %v92
  %v109 = vtanh.pop %v93
  %v110 = vtanh.pop %v94
  %v111 = vtanh.pop %v95
  %v112 = vtanh.pop %v96
  %v113 = vtanh.pop %v97
  %v114 = vtanh.pop %v98
  %v115 = vtanh.pop %v99
  %v116 = vtanh.pop %v100
  %v117 = vtanh.pop %v101
  %v118 = vtanh.pop %v102
  %v119 = vtanh.pop %v103
  %v120 = vadd.f32 %v104, 1.0
  %v121 = vadd.f32 %v105, 1.0
  %v122 = vadd.f32 %v106, 1.0
  %v123 = vadd.f32 %v107, 1.0
  %v124 = vadd.f32 %v108, 1.0
  %v125 = vadd.f32 %v109, 1.0
  %v126 = vadd.f32 %v110, 1.0
  %v127 = vadd.f32 %v111, 1.0
  %v128 = vadd.f32 %v112, 1.0
  %v129 = vadd.f32 %v113, 1.0
  %v130 = vadd.f32 %v114, 1.0
  %v131 = vadd.f32 %v115, 1.0
  %v132 = vadd.f32 %v116, 1.0
  %v133 = vadd.f32 %v117, 1.0
  %v134 = vadd.f32 %v118, 1.0
  %v135 = vadd.f32 %v119, 1.0
  %v136 = vmul.f32 %v120, 0.5
  %v137 = vmul.f32 %v121, 0.5
  %v138 = vmul.f32 %v122, 0.5
  %v139 = vmul.f32 %v123, 0.5
  %v140 = vmul.f32 %v124, 0.5
  %v141 = vmul.f32 %v125, 0.5
  %v142 = vmul.f32 %v126, 0.5
  %v143 = vmul.f32 %v127, 0.5
  %v144 = vmul.f32 %v128, 0.5
  %v145 = vmul.f32 %v129, 0.5
  %v146 = vmul.f32 %v130, 0.5
  %v147 = vmul.f32 %v131, 0.5
  %v148 = vmul.f32 %v132, 0.5
  %v149 = vmul.f32 %v133, 0.5
  %v150 = vmul.f32 %v134, 0.5
  %v151 = vmul.f32 %v135, 0.5
  %v152 = vmul.f32 %v8, %v136
  %v153 = vmul.f32 %v9, %v137
  %v154 = vmul.f32 %v10, %v138
  %v155 = vmul.f32 %v11, %v139
  %v156 = vmul.f32 %v12, %v140
  %v157 = vmul.f32 %v13, %v141
  %v158 = vmul.f32 %v14, %v142
  %v159 = vmul.f32 %v15, %v143
  %v160 = vmul.f32 %v16, %v144
  %v161 = vmul.f32 %v17, %v145
  %v162 = vmul.f32 %v18, %v146
  %v163 = vmul.f32 %v19, %v147
  %v164 = vmul.f32 %v20, %v148
  %v165 = vmul.f32 %v21, %v149
  %v166 = vmul.f32 %v22, %v150
  %v167 = vmul.f32 %v23, %v151
  %v168 = vadd.f32 %v152, %v8
  %v169 = vadd.f32 %v153, %v9
  %v170 = vadd.f32 %v154, %v10
  %v171 = vadd.f32 %v155, %v11
  %v172 = vadd.f32 %v156, %v12
  %v173 = vadd.f32 %v157, %v13
  %v174 = vadd.f32 %v158, %v14
  %v175 = vadd.f32 %v159, %v15
  %v176 = vadd.f32 %v160, %v16
  %v177 = vadd.f32 %v161, %v17
  %v178 = vadd.f32 %v162, %v18
  %v179 = vadd.f32 %v163, %v19
  %v180 = vadd.f32 %v164, %v20
  %v181 = vadd.f32 %v165, %v21
  %v182 = vadd.f32 %v166, %v22
  %v183 = vadd.f32 %v167, %v23
  %184 = vst [vmem:[%s1] sm:$0xff] %v168
  %185 = vst [vmem:[%s1 + $0x8] sm:$0xff] %v169
  %186 = vst [vmem:[%s1 + $0x10] sm:$0xff] %v170
  %187 = vst [vmem:[%s1 + $0x18] sm:$0xff] %v171
  %188 = vst [vmem:[%s1 + $0x20] sm:$0xff] %v172
  %189 = vst [vmem:[%s1 + $0x28] sm:$0xff] %v173
  %190 = vst [vmem:[%s1 + $0x30] sm:$0xff] %v174
  %191 = vst [vmem:[%s1 + $0x38] sm:$0xff] %v175
  %192 = vst [vmem:[%s1 + $0x40] sm:$0xff] %v176
  %193 = vst [vmem:[%s1 + $0x48] sm:$0xff] %v177
  %194 = vst [vmem:[%s1 + $0x50] sm:$0xff] %v178
  %195 = vst [vmem:[%s1 + $0x58] sm:$0xff] %v179
  %196 = vst [vmem:[%s1 + $0x60] sm:$0xff] %v180
  %197 = vst [vmem:[%s1 + $0x68] sm:$0xff] %v181
  %198 = vst [vmem:[%s1 + $0x70] sm:$0xff] %v182
  %199 = vst [vmem:[%s1 + $0x78] sm:$0xff] %v183
  // Predicated region
  $region6: #{_lambda_.1} parent=0 // pred_check
    _
  $region7: #{_lambda_.1} parent=0 // pred_check_branch
    %201 = sbr.rel (0) target = $region9
  $region8: #{_lambda_.1} parent=0 // pred_region
    _
  $region9: #{_lambda_.1} parent=0 // pred_fallthru
    _
  // Predicated region
  $region10: #{_lambda_.1} parent=0 // pred_check
    _
  $region11: #{_lambda_.1} parent=0 // pred_check_branch
    %203 = sbr.rel (0) target = $region13
  $region12: #{_lambda_.1} parent=0 // pred_region
    _
  $region13: #{_lambda_.1} parent=0 // pred_fallthru
    _

</llo_original>
